<compile_context>
chip_gen: v7x
topology: tpu7x:2x2x1
jax: 0.10.0
libtpu: 0.0.40
codegen_flags: <defaults>
</compile_context>

<pallas_src>
import functools

import jax
import jax.numpy as jnp
import numpy as np
from jax import lax
from jax.experimental import pallas as pl
from jax.experimental.pallas import tpu as pltpu


# ----------------------------- Pallas kernel -------------------------------

def activated_attention_kernel(x_ref, w_ref, b_ref, cos_ref, sine_ref, sino_ref,
                               red_ref, emean_ref, egamma_ref, beta_ref,
                               o_ref, qkv_ref, *,
                               seq_len, eps, mxu_dtype, kv_block):
    t = seq_len
    bb = o_ref.shape[0]          # batches folded into this grid step
    d = cos_ref.shape[1]
    n_kv = t // kv_block

    # ---- in_proj over all BB*T rows at once (one wide MXU tile) -------------
    # bf16/f32 operands, f32 accumulation; parked in VMEM scratch so the
    # per-batch loop slices it through a Ref (bounded live ranges).
    qkv_ref[...] = (jnp.dot(x_ref[...].astype(mxu_dtype), w_ref[...],
                            preferred_element_type=jnp.float32)
                    + b_ref[...])

    red = red_ref[...]          # (D, G) per-group averaging reduce (1/group_size)
    e_mean = emean_ref[...]     # (G, D) one-hot broadcast back to channels
    e_gamma = egamma_ref[...]   # (G, D) broadcast fused with GroupNorm gamma
    beta_col = beta_ref[...]    # (D, 1)
    cos_q = cos_ref[...]        # (T, D) RoPE tables (parity signs pre-folded)
    sin_e_q = sine_ref[...]     # -sin on even lanes, 0 on odd lanes
    sin_o_q = sino_ref[...]     # +sin on odd lanes, 0 on even lanes

    def rope(u, cos, sin_e, sin_o):
        # interleaved-pair rotation; rolls ride the otherwise-idle XLU slot
        return (u * cos
                + pltpu.roll(u, shift=d - 1, axis=1) * sin_e     # u[j+1] term
                + pltpu.roll(u, shift=1, axis=1) * sin_o)        # u[j-1] term

    def batch_body(bi, carry):
        r0 = bi * t
        if not isinstance(bi, int):
            r0 = pl.multiple_of(r0, t)

        q_raw = qkv_ref[pl.ds(r0, t), 0:d]
        qb = jnp.maximum(rope(q_raw, cos_q, sin_e_q, sin_o_q),
                         0.0).astype(mxu_dtype)                   # (T, D)

        # ---- K/V-blocked streaming attention (unnormalized, so a plain sum) --
        def kv_step(j, acc):
            c0 = pl.multiple_of(j * kv_block, kv_block)
            rows = pl.ds(r0 + c0, kv_block)
            tab = pl.ds(c0, kv_block)
            k_raw = qkv_ref[rows, d:2 * d]
            kj = jnp.maximum(rope(k_raw, cos_ref[tab, :], sine_ref[tab, :],
                                  sino_ref[tab, :]), 0.0).astype(mxu_dtype)
            vj = jnp.maximum(qkv_ref[rows, 2 * d:3 * d], 0.0).astype(mxu_dtype)
            a = lax.dot_general(qb, kj, (((1,), (1,)), ((), ())),
                                preferred_element_type=jnp.float32)   # (T, kv)
            return acc + jnp.dot(a.astype(mxu_dtype), vj,
                                 preferred_element_type=jnp.float32)  # (T, D)

        yb = lax.fori_loop(0, n_kv, kv_step, jnp.zeros((t, d), jnp.float32))

        # ---- GroupNorm: centered two-pass via tiny (D,G)/(G,D) matmuls -------
        mean_g = jnp.dot(yb, red, preferred_element_type=jnp.float32)         # (T, G)
        mean_b = jnp.dot(mean_g, e_mean, preferred_element_type=jnp.float32)  # (T, D)
        cent = yb - mean_b
        var_g = jnp.dot(cent * cent, red, preferred_element_type=jnp.float32) # (T, G)
        scale_b = jnp.dot(lax.rsqrt(var_g + eps), e_gamma,
                          preferred_element_type=jnp.float32)                 # (T, D)
        nb = cent * scale_b                                                   # VPU

        # ---- affine shift + module transpose: XLU transpose + VPU add --------
        o_ref[bi] = jnp.transpose(nb) + beta_col                              # (D, T)
        return carry

    if bb == 1:
        batch_body(0, 0)                        # static fast path (common case)
    else:
        lax.fori_loop(0, bb, batch_body, 0)     # bounded live ranges for BB > 1


# ------------------------------- wrapper ------------------------------------

def activated_attention(x, w, b, cos, sin, gamma, beta, *, num_groups, eps,
                        batch_block=None, kv_block=None, mxu_dtype=jnp.bfloat16):
    B, T, D = x.shape
    G = num_groups
    assert D % G == 0
    gs = D // G

    # batch folding: cap at B//2 so the grid has >=2 parallel steps (v7x: 2 TCs)
    if batch_block is None:
        cap = max(1, B // 2)
        batch_block = max(bb_ for bb_ in range(1, cap + 1) if B % bb_ == 0)
    BB = batch_block
    assert B % BB == 0

    # K/V streaming block (bounds the (T, kv) score tile at production T)
    if kv_block is None:
        kv_block = next((kb for kb in (512, 256, 128) if kb <= T and T % kb == 0), T)
    assert T % kv_block == 0

    # GroupNorm reduce / broadcast factors: (D,G) and (G,D), no (D,D) operands
    chan_group = np.arange(D) // gs
    red = (chan_group[:, None] == np.arange(G)[None, :]).astype(np.float32) / gs  # (D, G)
    e_mean = (np.arange(G)[:, None] == chan_group[None, :]).astype(np.float32)    # (G, D)
    e_gamma = e_mean * np.asarray(gamma, np.float32)[None, :]                     # gamma fused
    beta_col = jnp.asarray(beta, jnp.float32).reshape(D, 1)

    # RoPE tables (T, D): interleaved-pair signs folded into two sin tables
    lane = np.arange(D)
    cos_np = np.asarray(cos, np.float32)
    sin_np = np.asarray(sin, np.float32)
    sin_e = np.where(lane % 2 == 0, -sin_np, 0.0).astype(np.float32)
    sin_o = np.where(lane % 2 == 1, sin_np, 0.0).astype(np.float32)

    x2d = x.reshape(B * T, D)                 # free row-major relabel
    w_in = jnp.asarray(w, mxu_dtype)          # bf16 weight: halves VMEM + DMA
    b_in = jnp.asarray(b, jnp.float32).reshape(1, 3 * D)

    kernel = functools.partial(activated_attention_kernel, seq_len=T, eps=eps,
                               mxu_dtype=mxu_dtype, kv_block=kv_block)

    const = lambda i: (0, 0)
    single = pl.Buffered(1)   # grid-invariant blocks: no double-buffering

    in_specs = [
        pl.BlockSpec((BB * T, D), lambda i: (i, 0)),               # x rows (pipelined)
        pl.BlockSpec((D, 3 * D), const, pipeline_mode=single),     # in_proj weight
        pl.BlockSpec((1, 3 * D), const, pipeline_mode=single),     # in_proj bias
        pl.BlockSpec((T, D), const, pipeline_mode=single),         # RoPE cos
        pl.BlockSpec((T, D), const, pipeline_mode=single),         # RoPE -sin (even)
        pl.BlockSpec((T, D), const, pipeline_mode=single),         # RoPE +sin (odd)
        pl.BlockSpec((D, G), const, pipeline_mode=single),         # group reduce
        pl.BlockSpec((G, D), const, pipeline_mode=single),         # mean broadcast
        pl.BlockSpec((G, D), const, pipeline_mode=single),         # gamma broadcast
        pl.BlockSpec((D, 1), const, pipeline_mode=single),         # beta column
    ]

    # VMEM budget from actual block sizes (+ scratch + headroom), clamped to the
    # physical capacity of the current TPU generation.
    w_bytes = jnp.dtype(mxu_dtype).itemsize
    vmem_est = (
        2 * BB * T * D * 4            # x block, double-buffered
        + D * 3 * D * w_bytes         # weight, single-buffered
        + 3 * D * 4                   # bias
        + 3 * T * D * 4               # RoPE tables
        + (D * G + 2 * G * D + D) * 4  # GroupNorm factors + beta
        + 2 * BB * D * T * 4          # output block, double-buffered
        + BB * T * 3 * D * 4          # qkv scratch
    )
    try:
        phys_vmem = int(pltpu.get_tpu_info().vmem_capacity_bytes)
    except Exception:
        phys_vmem = 128 * 1024 * 1024
    vmem_limit = int(min(max(2 * vmem_est + (8 << 20), 32 << 20),
                         int(0.85 * phys_vmem)))

    out = pl.pallas_call(
        kernel,
        out_shape=jax.ShapeDtypeStruct((B, D, T), jnp.float32),
        grid_spec=pltpu.PrefetchScalarGridSpec(
            num_scalar_prefetch=0,
            grid=(B // BB,),
            in_specs=in_specs,
            out_specs=pl.BlockSpec((BB, D, T), lambda i: (i, 0, 0)),
            scratch_shapes=[pltpu.VMEM((BB * T, 3 * D), jnp.float32)],
        ),
        compiler_params=pltpu.CompilerParams(
            dimension_semantics=("parallel",),
            vmem_limit_bytes=vmem_limit,
        ),
    )(x2d, w_in, b_in, jnp.asarray(cos_np), jnp.asarray(sin_e), jnp.asarray(sin_o),
      jnp.asarray(red), jnp.asarray(e_mean), jnp.asarray(e_gamma), beta_col)

    # module's final transpose(-2,-1).reshape(B,T,dim): free row-major relabel
    return out.reshape(B, T, D)


# --------------------------- plain-JAX reference ----------------------------

def reference(x, w, b, cos, sin, gamma, beta, *, num_groups, eps):
    B, T, D = x.shape
    qkv = x @ w + b
    q, k, v = jnp.split(qkv, 3, axis=-1)

    def rope(t):
        t2 = t.reshape(*t.shape[:-1], D // 2, 2)
        rh = jnp.stack([-t2[..., 1], t2[..., 0]], axis=-1).reshape(t.shape)
        return t * cos + rh * sin

    q = jax.nn.relu(rope(q))
    k = jax.nn.relu(rope(k))
    v = jax.nn.relu(v)
    a = jnp.einsum("btd,bsd->bts", q, k)
    y = jnp.einsum("bts,bsd->btd", a, v)

    yr = y.reshape(-1, num_groups, D // num_groups)
    mean = yr.mean(-1, keepdims=True)
    var = ((yr - mean) ** 2).mean(-1, keepdims=True)
    yn = ((yr - mean) / jnp.sqrt(var + eps)).reshape(-1, D) * gamma + beta
    yn = yn.reshape(B, T, D)
    return yn.transpose(0, 2, 1).reshape(B, T, D)


# --------------------------------- main -------------------------------------

if __name__ == "__main__":
    B, T, D = 2, 8, 32          # batch, seq, hidden_size
    G = 4                       # num_norm_groups
    EPS = 1e-5                  # group_norm_eps

    key = jax.random.PRNGKey(0)
    kx, kw, kb, kg, kbt = jax.random.split(key, 5)

    x = jax.random.normal(kx, (B, T, D), dtype=jnp.float32)
    w = 0.05 * jax.random.normal(kw, (D, 3 * D), dtype=jnp.float32)   # in_proj weight (dim -> 3*dim)
    b = 0.05 * jax.random.normal(kb, (3 * D,), dtype=jnp.float32)     # in_proj bias
    gamma = 1.0 + 0.1 * jax.random.normal(kg, (D,), dtype=jnp.float32)   # GroupNorm weight
    beta = 0.05 * jax.random.normal(kbt, (D,), dtype=jnp.float32)        # GroupNorm bias

    # RoPE tables (lucidrains convention: theta=10000, interleaved repeat r=2)
    inv_freq = 1.0 / (10000.0 ** (jnp.arange(0, D, 2, dtype=jnp.float32) / D))
    freqs = jnp.arange(T, dtype=jnp.float32)[:, None] * inv_freq[None, :]   # (T, D/2)
    freqs = jnp.repeat(freqs, 2, axis=-1)                                   # (T, D)
    cos_tab = jnp.cos(freqs)
    sin_tab = jnp.sin(freqs)

    ref = reference(x, w, b, cos_tab, sin_tab, gamma, beta,
                    num_groups=G, eps=EPS)

    # f32 MXU path, default BB=1 (two parallel grid steps -> both v7x TCs busy).
    out = activated_attention(x, w, b, cos_tab, sin_tab, gamma, beta,
                              num_groups=G, eps=EPS, mxu_dtype=jnp.float32)
    out = jax.block_until_ready(out)
    np.testing.assert_allclose(np.asarray(out), np.asarray(ref),
                               rtol=5e-4, atol=5e-4)

    # f32 path with explicit batch folding (BB=2): exercises the in-kernel
    # fori_loop over batches (dynamic slicing / dynamic output index).
    out_bb = activated_attention(x, w, b, cos_tab, sin_tab, gamma, beta,
                                 num_groups=G, eps=EPS, batch_block=2,
                                 mxu_dtype=jnp.float32)
    out_bb = jax.block_until_ready(out_bb)
    np.testing.assert_allclose(np.asarray(out_bb), np.asarray(ref),
                               rtol=5e-4, atol=5e-4)

    # bf16 MXU operands for in_proj + attention dots (v5e/v6e/v7x fast path):
    # loose tolerance by design.
    out_bf16 = activated_attention(x, w, b, cos_tab, sin_tab, gamma, beta,
                                   num_groups=G, eps=EPS, mxu_dtype=jnp.bfloat16)
    out_bf16 = jax.block_until_ready(out_bf16)
    np.testing.assert_allclose(np.asarray(out_bf16), np.asarray(ref),
                               rtol=2e-1, atol=2e-1)

    print("KERNEL_OK")
</pallas_src>

<mosaic_0001>
module attributes {stable_mosaic.version = 11 : i64} {
  func.func @activated_attention_kernel(%arg0: i32, %arg1: memref<8x32xf32, #tpu.memory_space<vmem>>, %arg2: memref<32x96xf32, #tpu.memory_space<vmem>>, %arg3: memref<1x96xf32, #tpu.memory_space<vmem>>, %arg4: memref<8x32xf32, #tpu.memory_space<vmem>>, %arg5: memref<8x32xf32, #tpu.memory_space<vmem>>, %arg6: memref<8x32xf32, #tpu.memory_space<vmem>>, %arg7: memref<32x4xf32, #tpu.memory_space<vmem>>, %arg8: memref<4x32xf32, #tpu.memory_space<vmem>>, %arg9: memref<4x32xf32, #tpu.memory_space<vmem>>, %arg10: memref<32x1xf32, #tpu.memory_space<vmem>>, %arg11: memref<1x32x8xf32, #tpu.memory_space<vmem>>, %arg12: memref<8x96xf32, #tpu.memory_space<vmem>>) attributes {dimension_semantics = [#tpu.dimension_semantics<parallel>], iteration_bounds = array<i64: 2>, scalar_prefetch = 0 : i64, scratch_operands = 1 : i64, tpu.core_type = #tpu.core_type<tc>, window_params = [{transform_indices = @transform_0, window_bounds = array<i64: 8, 32>}, {pipeline_mode = #tpu.pipeline_mode<synchronous>, transform_indices = @transform_1, window_bounds = array<i64: 32, 96>}, {pipeline_mode = #tpu.pipeline_mode<synchronous>, transform_indices = @transform_2, window_bounds = array<i64: 1, 96>}, {pipeline_mode = #tpu.pipeline_mode<synchronous>, transform_indices = @transform_3, window_bounds = array<i64: 8, 32>}, {pipeline_mode = #tpu.pipeline_mode<synchronous>, transform_indices = @transform_4, window_bounds = array<i64: 8, 32>}, {pipeline_mode = #tpu.pipeline_mode<synchronous>, transform_indices = @transform_5, window_bounds = array<i64: 8, 32>}, {pipeline_mode = #tpu.pipeline_mode<synchronous>, transform_indices = @transform_6, window_bounds = array<i64: 32, 4>}, {pipeline_mode = #tpu.pipeline_mode<synchronous>, transform_indices = @transform_7, window_bounds = array<i64: 4, 32>}, {pipeline_mode = #tpu.pipeline_mode<synchronous>, transform_indices = @transform_8, window_bounds = array<i64: 4, 32>}, {pipeline_mode = #tpu.pipeline_mode<synchronous>, transform_indices = @transform_9, window_bounds = array<i64: 32, 1>}, {transform_indices = @transform_10, window_bounds = array<i64: 1, 32, 8>}]} {
    %c0 = arith.constant 0 : index
    %c0_0 = arith.constant 0 : index
    %0 = vector.load %arg1[%c0, %c0_0] : memref<8x32xf32, #tpu.memory_space<vmem>>, vector<8x32xf32>
    %c0_1 = arith.constant 0 : index
    %c0_2 = arith.constant 0 : index
    %1 = vector.load %arg2[%c0_1, %c0_2] : memref<32x96xf32, #tpu.memory_space<vmem>>, vector<32x96xf32>
    %cst = arith.constant dense<0.000000e+00> : vector<8x96xf32>
    %2 = tpu.matmul %0, %1, %cst {dimension_numbers = #tpu.dot_dimension_numbers<[1], [0], [0], [1], [0, 0, 1, 1], [], []>} : vector<8x32xf32>, vector<32x96xf32>, vector<8x96xf32> -> vector<8x96xf32>
    %c0_3 = arith.constant 0 : index
    %c0_4 = arith.constant 0 : index
    %3 = vector.load %arg3[%c0_3, %c0_4] : memref<1x96xf32, #tpu.memory_space<vmem>>, vector<1x96xf32>
    %4 = vector.broadcast %3 : vector<1x96xf32> to vector<8x96xf32>
    %5 = arith.addf %2, %4 : vector<8x96xf32>
    %c0_5 = arith.constant 0 : index
    %c0_6 = arith.constant 0 : index
    %6 = vector.load %arg12[%c0_5, %c0_6] : memref<8x96xf32, #tpu.memory_space<vmem>>, vector<8x96xf32>
    tpu.vector_store %arg12[%c0_5, %c0_6], %5 {strides = array<i32>} : memref<8x96xf32, #tpu.memory_space<vmem>>, vector<8x96xf32>,
    %c0_7 = arith.constant 0 : index
    %c0_8 = arith.constant 0 : index
    %7 = vector.load %arg7[%c0_7, %c0_8] : memref<32x4xf32, #tpu.memory_space<vmem>>, vector<32x4xf32>
    %c0_9 = arith.constant 0 : index
    %c0_10 = arith.constant 0 : index
    %8 = vector.load %arg8[%c0_9, %c0_10] : memref<4x32xf32, #tpu.memory_space<vmem>>, vector<4x32xf32>
    %c0_11 = arith.constant 0 : index
    %c0_12 = arith.constant 0 : index
    %9 = vector.load %arg9[%c0_11, %c0_12] : memref<4x32xf32, #tpu.memory_space<vmem>>, vector<4x32xf32>
    %c0_13 = arith.constant 0 : index
    %c0_14 = arith.constant 0 : index
    %10 = vector.load %arg10[%c0_13, %c0_14] : memref<32x1xf32, #tpu.memory_space<vmem>>, vector<32x1xf32>
    %c0_15 = arith.constant 0 : index
    %c0_16 = arith.constant 0 : index
    %11 = vector.load %arg4[%c0_15, %c0_16] : memref<8x32xf32, #tpu.memory_space<vmem>>, vector<8x32xf32>
    %c0_17 = arith.constant 0 : index
    %c0_18 = arith.constant 0 : index
    %12 = vector.load %arg5[%c0_17, %c0_18] : memref<8x32xf32, #tpu.memory_space<vmem>>, vector<8x32xf32>
    %c0_19 = arith.constant 0 : index
    %c0_20 = arith.constant 0 : index
    %13 = vector.load %arg6[%c0_19, %c0_20] : memref<8x32xf32, #tpu.memory_space<vmem>>, vector<8x32xf32>
    %c0_21 = arith.constant 0 : index
    %c0_22 = arith.constant 0 : index
    %14 = vector.load %arg12[%c0_21, %c0_22] : memref<8x96xf32, #tpu.memory_space<vmem>>, vector<8x32xf32>
    %15 = arith.mulf %14, %11 : vector<8x32xf32>
    %c31_i32 = arith.constant 31 : i32
    %16 = tpu.dynamic_rotate %14 by %c31_i32 dim 1 : vector<8x32xf32>, i32 -> vector<8x32xf32>
    %17 = arith.mulf %16, %12 : vector<8x32xf32>
    %18 = arith.addf %15, %17 : vector<8x32xf32>
    %c1_i32 = arith.constant 1 : i32
    %19 = tpu.dynamic_rotate %14 by %c1_i32 dim 1 : vector<8x32xf32>, i32 -> vector<8x32xf32>
    %20 = arith.mulf %19, %13 : vector<8x32xf32>
    %21 = arith.addf %18, %20 : vector<8x32xf32>
    %cst_23 = arith.constant 0.000000e+00 : f32
    %22 = vector.broadcast %cst_23 : f32 to vector<8x32xf32>
    %23 = arith.maximumf %21, %22 : vector<8x32xf32>
    %cst_24 = arith.constant 0.000000e+00 : f32
    %24 = vector.broadcast %cst_24 : f32 to vector<8x32xf32>
    %c0_i32 = arith.constant 0 : i32
    %c8_i32 = arith.constant 8 : i32
    %25 = arith.muli %c0_i32, %c8_i32 : i32
    %26 = tpu.assume_multiple %25, 8 : i32
    %c0_i32_25 = arith.constant 0 : i32
    %27 = arith.addi %c0_i32_25, %26 : i32
    %28 = arith.index_cast %27 : i32 to index
    %c32 = arith.constant 32 : index
    %29 = vector.load %arg12[%28, %c32] : memref<8x96xf32, #tpu.memory_space<vmem>>, vector<8x32xf32>
    %30 = arith.index_cast %26 : i32 to index
    %c0_26 = arith.constant 0 : index
    %31 = vector.load %arg4[%30, %c0_26] : memref<8x32xf32, #tpu.memory_space<vmem>>, vector<8x32xf32>
    %32 = arith.index_cast %26 : i32 to index
    %c0_27 = arith.constant 0 : index
    %33 = vector.load %arg5[%32, %c0_27] : memref<8x32xf32, #tpu.memory_space<vmem>>, vector<8x32xf32>
    %34 = arith.index_cast %26 : i32 to index
    %c0_28 = arith.constant 0 : index
    %35 = vector.load %arg6[%34, %c0_28] : memref<8x32xf32, #tpu.memory_space<vmem>>, vector<8x32xf32>
    %36 = arith.mulf %29, %31 : vector<8x32xf32>
    %c31_i32_29 = arith.constant 31 : i32
    %37 = tpu.dynamic_rotate %29 by %c31_i32_29 dim 1 : vector<8x32xf32>, i32 -> vector<8x32xf32>
    %38 = arith.mulf %37, %33 : vector<8x32xf32>
    %39 = arith.addf %36, %38 : vector<8x32xf32>
    %c1_i32_30 = arith.constant 1 : i32
    %40 = tpu.dynamic_rotate %29 by %c1_i32_30 dim 1 : vector<8x32xf32>, i32 -> vector<8x32xf32>
    %41 = arith.mulf %40, %35 : vector<8x32xf32>
    %42 = arith.addf %39, %41 : vector<8x32xf32>
    %cst_31 = arith.constant 0.000000e+00 : f32
    %43 = vector.broadcast %cst_31 : f32 to vector<8x32xf32>
    %44 = arith.maximumf %42, %43 : vector<8x32xf32>
    %45 = arith.index_cast %27 : i32 to index
    %c64 = arith.constant 64 : index
    %46 = vector.load %arg12[%45, %c64] : memref<8x96xf32, #tpu.memory_space<vmem>>, vector<8x32xf32>
    %cst_32 = arith.constant 0.000000e+00 : f32
    %47 = vector.broadcast %cst_32 : f32 to vector<8x32xf32>
    %48 = arith.maximumf %46, %47 : vector<8x32xf32>
    %cst_33 = arith.constant dense<0.000000e+00> : vector<8x8xf32>
    %49 = tpu.matmul %23, %44, %cst_33 {dimension_numbers = #tpu.dot_dimension_numbers<[1], [1], [0], [0], [0, 0, 1, 0], [], []>} : vector<8x32xf32>, vector<8x32xf32>, vector<8x8xf32> -> vector<8x8xf32>
    %cst_34 = arith.constant dense<0.000000e+00> : vector<8x32xf32>
    %50 = tpu.matmul %49, %48, %cst_34 {dimension_numbers = #tpu.dot_dimension_numbers<[1], [0], [0], [1], [0, 0, 1, 1], [], []>} : vector<8x8xf32>, vector<8x32xf32>, vector<8x32xf32> -> vector<8x32xf32>
    %51 = arith.addf %24, %50 : vector<8x32xf32>
    %c1_i32_35 = arith.constant 1 : i32
    %cst_36 = arith.constant dense<0.000000e+00> : vector<8x4xf32>
    %52 = tpu.matmul %51, %7, %cst_36 {dimension_numbers = #tpu.dot_dimension_numbers<[1], [0], [0], [1], [0, 0, 1, 1], [], []>} : vector<8x32xf32>, vector<32x4xf32>, vector<8x4xf32> -> vector<8x4xf32>
    %cst_37 = arith.constant dense<0.000000e+00> : vector<8x32xf32>
    %53 = tpu.matmul %52, %8, %cst_37 {dimension_numbers = #tpu.dot_dimension_numbers<[1], [0], [0], [1], [0, 0, 1, 1], [], []>} : vector<8x4xf32>, vector<4x32xf32>, vector<8x32xf32> -> vector<8x32xf32>
    %54 = arith.subf %51, %53 : vector<8x32xf32>
    %55 = arith.mulf %54, %54 : vector<8x32xf32>
    %cst_38 = arith.constant dense<0.000000e+00> : vector<8x4xf32>
    %56 = tpu.matmul %55, %7, %cst_38 {dimension_numbers = #tpu.dot_dimension_numbers<[1], [0], [0], [1], [0, 0, 1, 1], [], []>} : vector<8x32xf32>, vector<32x4xf32>, vector<8x4xf32> -> vector<8x4xf32>
    %cst_39 = arith.constant 9.99999974E-6 : f32
    %57 = vector.broadcast %cst_39 : f32 to vector<8x4xf32>
    %58 = arith.addf %56, %57 : vector<8x4xf32>
    %59 = math.rsqrt %58 : vector<8x4xf32>
    %cst_40 = arith.constant dense<0.000000e+00> : vector<8x32xf32>
    %60 = tpu.matmul %59, %9, %cst_40 {dimension_numbers = #tpu.dot_dimension_numbers<[1], [0], [0], [1], [0, 0, 1, 1], [], []>} : vector<8x4xf32>, vector<4x32xf32>, vector<8x32xf32> -> vector<8x32xf32>
    %61 = arith.mulf %54, %60 : vector<8x32xf32>
    %62 = tpu.transpose %61, [1, 0] : vector<8x32xf32> -> vector<32x8xf32>
    %63 = vector.broadcast %10 : vector<32x1xf32> to vector<32x8xf32>
    %64 = arith.addf %62, %63 : vector<32x8xf32>
    %c0_41 = arith.constant 0 : index
    %c0_42 = arith.constant 0 : index
    %c0_43 = arith.constant 0 : index
    %65 = vector.load %arg11[%c0_41, %c0_42, %c0_43] : memref<1x32x8xf32, #tpu.memory_space<vmem>>, vector<1x32x8xf32>
    %66 = vector.shape_cast %65 : vector<1x32x8xf32> to vector<32x8xf32>
    %67 = vector.shape_cast %64 : vector<32x8xf32> to vector<1x32x8xf32>
    tpu.vector_store %arg11[%c0_41, %c0_42, %c0_43], %67 {strides = array<i32>} : memref<1x32x8xf32, #tpu.memory_space<vmem>>, vector<1x32x8xf32>,
    return
  }
  func.func @transform_0(%arg0: i32) -> (i32, i32) {
    %c0_i32 = arith.constant 0 : i32
    %c0_i32_0 = arith.constant 0 : i32
    return %arg0, %c0_i32 : i32, i32
  }
  func.func @transform_1(%arg0: i32) -> (i32, i32) {
    %c0_i32 = arith.constant 0 : i32
    %c0_i32_0 = arith.constant 0 : i32
    %c0_i32_1 = arith.constant 0 : i32
    return %c0_i32, %c0_i32_0 : i32, i32
  }
  func.func @transform_2(%arg0: i32) -> (i32, i32) {
    %c0_i32 = arith.constant 0 : i32
    %c0_i32_0 = arith.constant 0 : i32
    %c0_i32_1 = arith.constant 0 : i32
    return %c0_i32, %c0_i32_0 : i32, i32
  }
  func.func @transform_3(%arg0: i32) -> (i32, i32) {
    %c0_i32 = arith.constant 0 : i32
    %c0_i32_0 = arith.constant 0 : i32
    %c0_i32_1 = arith.constant 0 : i32
    return %c0_i32, %c0_i32_0 : i32, i32
  }
  func.func @transform_4(%arg0: i32) -> (i32, i32) {
    %c0_i32 = arith.constant 0 : i32
    %c0_i32_0 = arith.constant 0 : i32
    %c0_i32_1 = arith.constant 0 : i32
    return %c0_i32, %c0_i32_0 : i32, i32
  }
  func.func @transform_5(%arg0: i32) -> (i32, i32) {
    %c0_i32 = arith.constant 0 : i32
    %c0_i32_0 = arith.constant 0 : i32
    %c0_i32_1 = arith.constant 0 : i32
    return %c0_i32, %c0_i32_0 : i32, i32
  }
  func.func @transform_6(%arg0: i32) -> (i32, i32) {
    %c0_i32 = arith.constant 0 : i32
    %c0_i32_0 = arith.constant 0 : i32
    %c0_i32_1 = arith.constant 0 : i32
    return %c0_i32, %c0_i32_0 : i32, i32
  }
  func.func @transform_7(%arg0: i32) -> (i32, i32) {
    %c0_i32 = arith.constant 0 : i32
    %c0_i32_0 = arith.constant 0 : i32
    %c0_i32_1 = arith.constant 0 : i32
    return %c0_i32, %c0_i32_0 : i32, i32
  }
  func.func @transform_8(%arg0: i32) -> (i32, i32) {
    %c0_i32 = arith.constant 0 : i32
    %c0_i32_0 = arith.constant 0 : i32
    %c0_i32_1 = arith.constant 0 : i32
    return %c0_i32, %c0_i32_0 : i32, i32
  }
  func.func @transform_9(%arg0: i32) -> (i32, i32) {
    %c0_i32 = arith.constant 0 : i32
    %c0_i32_0 = arith.constant 0 : i32
    %c0_i32_1 = arith.constant 0 : i32
    return %c0_i32, %c0_i32_0 : i32, i32
  }
  func.func @transform_10(%arg0: i32) -> (i32, i32, i32) {
    %c0_i32 = arith.constant 0 : i32
    %c0_i32_0 = arith.constant 0 : i32
    %c0_i32_1 = arith.constant 0 : i32
    return %arg0, %c0_i32, %c0_i32_0 : i32, i32, i32
  }
}

</mosaic_0001>

<llo_original>
// kernel: tpu_custom_call.1
$region0: #{tpu_custom_call.1}
  #allocation0 [shape = 'u32[]', space=smem, size = 0x4, offset = 0x4, fixed_abs, tag = 'smem constant byte address 0x4 - core index']
  #allocation1 [shape = 'u32[144,128]{1,0:T(1,128)}', space=vmem, size = 0x12000, scoped, tag = 'internal scratch']
  #allocation2 [shape = 'f32[8,96]{1,0:T(8,128)}', space=vmem, size = 0x1000, scoped, tag = 'scratch operand']
  %s0 = inlined_call_operand.vmem [shape: f32[16,32], index: 0, kind: input, shape index: {}]
  %s1 = inlined_call_operand.vmem [shape: f32[32,96], index: 1, kind: input, shape index: {}]
  %s2 = inlined_call_operand.hbm [shape: f32[1,96], index: 2, kind: input, shape index: {}]
  %s3 = inlined_call_operand.vmem [shape: f32[8,32], index: 3, kind: input, shape index: {}]
  %s4 = inlined_call_operand.vmem [shape: f32[8,32], index: 4, kind: input, shape index: {}]
  %s5 = inlined_call_operand.vmem [shape: f32[8,32], index: 5, kind: input, shape index: {}]
  %s6 = inlined_call_operand.vmem [shape: f32[32,4], index: 6, kind: input, shape index: {}]
  %s7 = inlined_call_operand.vmem [shape: f32[4,32], index: 7, kind: input, shape index: {}]
  %s8 = inlined_call_operand.vmem [shape: f32[4,32], index: 8, kind: input, shape index: {}]
  %s9 = inlined_call_operand.vmem [shape: f32[32,1], index: 9, kind: input, shape index: {}]
  %s10 = inlined_call_operand.vmem [shape: f32[2,32,8], index: 10, kind: output, shape index: {}]
  %s11 = sld [smem:[#allocation0]]
  $region77: #{tpu_custom_call.1} parent=0
    _
  %s13 = ssub.s32 1, %s11
  %s14 = scalar_select 0, %s13, %s11
  $region1: #{tpu_custom_call.1} parent=0
    #allocation3 [shape = 'u8[512]{0}', space=vmem, size = 0x400, scoped, tag = 'input window, operand 2, single buffered']
    #allocation4 [shape = 's32[2]{0}', space=sflag, size = 0x8, scoped, tag = 'scoped memory for tpu_custom_call.1']
    %15 = vsyncpa [#allocation4], 0
    loop: start=0, step=1, limit=4
    $region2: #{tpu_custom_call.1} parent=1 // loop_pre_header
      _
    $region3: #{tpu_custom_call.1} parent=1 // loop_header
      %s17 = sphi 0, %s21
      %p18 = scmp.ge.s32.totalorder %s17, 4
      %s27 = sphi 0, %s29
      %s30 = sphi 0, %s27
      %s31 = sphi 0, %s30
      %s47 = sphi 0, %s31
      %s51 = sphi 0, %s51
      %s53 = sphi 0, %s51
      %s54 = sphi 0, %s53
      %s68 = sphi 0, %s54
      %s72 = sphi 0, %s72
      %s74 = sphi 0, %s72
      %s75 = sphi 0, %s74
      %s89 = sphi 0, %s75
      %s93 = sphi 0, %s93
      %s95 = sphi 0, %s93
      %s96 = sphi 0, %s95
      %s110 = sphi 0, %s96
      %s114 = sphi 0, %s114
      %s116 = sphi 0, %s114
      %s117 = sphi 0, %s116
      %s131 = sphi 0, %s117
      %s135 = sphi 0, %s135
      %s137 = sphi 0, %s135
      %s138 = sphi 0, %s137
      %s152 = sphi 0, %s138
      %s156 = sphi 0, %s156
      %s158 = sphi 0, %s156
      %s159 = sphi 0, %s158
      %s173 = sphi 0, %s159
      %s177 = sphi 0, %s177
      %s179 = sphi 0, %s177
      %s180 = sphi 0, %s179
      %s194 = sphi 0, %s180
      %s198 = sphi 0, %s198
      %s200 = sphi 0, %s198
      %s201 = sphi 0, %s200
      %s215 = sphi 0, %s201
      %s219 = sphi 0, %s219
      %s221 = sphi 0, %s219
      %s222 = sphi 0, %s221
      %s236 = sphi 0, %s222
      %s242 = sphi 0, %s244
      %s245 = sphi 0, %s242
      %s246 = sphi 0, %s245
      %s262 = sphi 0, %s246
    $region4: #{tpu_custom_call.1} parent=1 // loop_header_branch
      %20 = sbr.rel (%p18) target = $region8
    $region5: #{tpu_custom_call.1} parent=1 // loop_body
      %s22 = ssub.s32 %s17, 1
      %s23 = ssub.s32 %s17, 2
      %s24 = sadd.s32 %s17, 1
      %s25 = ssub.s32 %s17, %s24
      %p26 = scmp.eq.s32.totalorder %s25, 0
      %s28 = sadd.s32 %s27, 1
      %s29 = scalar_select %p26, %s27, %s28
      %p32 = pneg %p26
      %p33 = scmp.eq.s32.totalorder %s17, 1
      %p34 = por %p32, %p33
      %p35 = scmp.ne.s32.totalorder %s27, %s30
      %p36 = scmp.eq.s32.totalorder %s17, 0
      %p37 = por %p35, %p36
      %p38 = scmp.ne.s32.totalorder %s27, %s30
      %p39 = scmp.eq.s32.totalorder %s22, 1
      %p40 = por %p38, %p39
      %p41 = scmp.ne.s32.totalorder %s30, %s31
      %p42 = scmp.eq.s32.totalorder %s22, 0
      %p43 = por %p41, %p42
      %p44 = scmp.ne.s32.totalorder %s30, %s31
      %p45 = scmp.eq.s32.totalorder %s23, 1
      %p46 = por %p44, %p45
      %p48 = scmp.ne.s32.totalorder %s31, %s47
      %p49 = scmp.eq.s32.totalorder %s23, 0
      %p50 = por %p48, %p49
      %s52 = sadd.s32 %s51, 1
      %p55 = scmp.eq.s32.totalorder %s17, 1
      %p56 = scmp.ne.s32.totalorder %s51, %s53
      %p57 = scmp.eq.s32.totalorder %s17, 0
      %p58 = por %p56, %p57
      %p59 = scmp.ne.s32.totalorder %s51, %s53
      %p60 = scmp.eq.s32.totalorder %s22, 1
      %p61 = por %p59, %p60
      %p62 = scmp.ne.s32.totalorder %s53, %s54
      %p63 = scmp.eq.s32.totalorder %s22, 0
      %p64 = por %p62, %p63
      %p65 = scmp.ne.s32.totalorder %s53, %s54
      %p66 = scmp.eq.s32.totalorder %s23, 1
      %p67 = por %p65, %p66
      %p69 = scmp.ne.s32.totalorder %s54, %s68
      %p70 = scmp.eq.s32.totalorder %s23, 0
      %p71 = por %p69, %p70
      %s73 = sadd.s32 %s72, 1
      %p76 = scmp.eq.s32.totalorder %s17, 1
      %p77 = scmp.ne.s32.totalorder %s72, %s74
      %p78 = scmp.eq.s32.totalorder %s17, 0
      %p79 = por %p77, %p78
      %p80 = scmp.ne.s32.totalorder %s72, %s74
      %p81 = scmp.eq.s32.totalorder %s22, 1
      %p82 = por %p80, %p81
      %p83 = scmp.ne.s32.totalorder %s74, %s75
      %p84 = scmp.eq.s32.totalorder %s22, 0
      %p85 = por %p83, %p84
      %p86 = scmp.ne.s32.totalorder %s74, %s75
      %p87 = scmp.eq.s32.totalorder %s23, 1
      %p88 = por %p86, %p87
      %p90 = scmp.ne.s32.totalorder %s75, %s89
      %p91 = scmp.eq.s32.totalorder %s23, 0
      %p92 = por %p90, %p91
      %s94 = sadd.s32 %s93, 1
      %p97 = scmp.eq.s32.totalorder %s17, 1
      %p98 = scmp.ne.s32.totalorder %s93, %s95
      %p99 = scmp.eq.s32.totalorder %s17, 0
      %p100 = por %p98, %p99
      %p101 = scmp.ne.s32.totalorder %s93, %s95
      %p102 = scmp.eq.s32.totalorder %s22, 1
      %p103 = por %p101, %p102
      %p104 = scmp.ne.s32.totalorder %s95, %s96
      %p105 = scmp.eq.s32.totalorder %s22, 0
      %p106 = por %p104, %p105
      %p107 = scmp.ne.s32.totalorder %s95, %s96
      %p108 = scmp.eq.s32.totalorder %s23, 1
      %p109 = por %p107, %p108
      %p111 = scmp.ne.s32.totalorder %s96, %s110
      %p112 = scmp.eq.s32.totalorder %s23, 0
      %p113 = por %p111, %p112
      %s115 = sadd.s32 %s114, 1
      %p118 = scmp.eq.s32.totalorder %s17, 1
      %p119 = scmp.ne.s32.totalorder %s114, %s116
      %p120 = scmp.eq.s32.totalorder %s17, 0
      %p121 = por %p119, %p120
      %p122 = scmp.ne.s32.totalorder %s114, %s116
      %p123 = scmp.eq.s32.totalorder %s22, 1
      %p124 = por %p122, %p123
      %p125 = scmp.ne.s32.totalorder %s116, %s117
      %p126 = scmp.eq.s32.totalorder %s22, 0
      %p127 = por %p125, %p126
      %p128 = scmp.ne.s32.totalorder %s116, %s117
      %p129 = scmp.eq.s32.totalorder %s23, 1
      %p130 = por %p128, %p129
      %p132 = scmp.ne.s32.totalorder %s117, %s131
      %p133 = scmp.eq.s32.totalorder %s23, 0
      %p134 = por %p132, %p133
      %s136 = sadd.s32 %s135, 1
      %p139 = scmp.eq.s32.totalorder %s17, 1
      %p140 = scmp.ne.s32.totalorder %s135, %s137
      %p141 = scmp.eq.s32.totalorder %s17, 0
      %p142 = por %p140, %p141
      %p143 = scmp.ne.s32.totalorder %s135, %s137
      %p144 = scmp.eq.s32.totalorder %s22, 1
      %p145 = por %p143, %p144
      %p146 = scmp.ne.s32.totalorder %s137, %s138
      %p147 = scmp.eq.s32.totalorder %s22, 0
      %p148 = por %p146, %p147
      %p149 = scmp.ne.s32.totalorder %s137, %s138
      %p150 = scmp.eq.s32.totalorder %s23, 1
      %p151 = por %p149, %p150
      %p153 = scmp.ne.s32.totalorder %s138, %s152
      %p154 = scmp.eq.s32.totalorder %s23, 0
      %p155 = por %p153, %p154
      %s157 = sadd.s32 %s156, 1
      %p160 = scmp.eq.s32.totalorder %s17, 1
      %p161 = scmp.ne.s32.totalorder %s156, %s158
      %p162 = scmp.eq.s32.totalorder %s17, 0
      %p163 = por %p161, %p162
      %p164 = scmp.ne.s32.totalorder %s156, %s158
      %p165 = scmp.eq.s32.totalorder %s22, 1
      %p166 = por %p164, %p165
      %p167 = scmp.ne.s32.totalorder %s158, %s159
      %p168 = scmp.eq.s32.totalorder %s22, 0
      %p169 = por %p167, %p168
      %p170 = scmp.ne.s32.totalorder %s158, %s159
      %p171 = scmp.eq.s32.totalorder %s23, 1
      %p172 = por %p170, %p171
      %p174 = scmp.ne.s32.totalorder %s159, %s173
      %p175 = scmp.eq.s32.totalorder %s23, 0
      %p176 = por %p174, %p175
      %s178 = sadd.s32 %s177, 1
      %p181 = scmp.eq.s32.totalorder %s17, 1
      %p182 = scmp.ne.s32.totalorder %s177, %s179
      %p183 = scmp.eq.s32.totalorder %s17, 0
      %p184 = por %p182, %p183
      %p185 = scmp.ne.s32.totalorder %s177, %s179
      %p186 = scmp.eq.s32.totalorder %s22, 1
      %p187 = por %p185, %p186
      %p188 = scmp.ne.s32.totalorder %s179, %s180
      %p189 = scmp.eq.s32.totalorder %s22, 0
      %p190 = por %p188, %p189
      %p191 = scmp.ne.s32.totalorder %s179, %s180
      %p192 = scmp.eq.s32.totalorder %s23, 1
      %p193 = por %p191, %p192
      %p195 = scmp.ne.s32.totalorder %s180, %s194
      %p196 = scmp.eq.s32.totalorder %s23, 0
      %p197 = por %p195, %p196
      %s199 = sadd.s32 %s198, 1
      %p202 = scmp.eq.s32.totalorder %s17, 1
      %p203 = scmp.ne.s32.totalorder %s198, %s200
      %p204 = scmp.eq.s32.totalorder %s17, 0
      %p205 = por %p203, %p204
      %p206 = scmp.ne.s32.totalorder %s198, %s200
      %p207 = scmp.eq.s32.totalorder %s22, 1
      %p208 = por %p206, %p207
      %p209 = scmp.ne.s32.totalorder %s200, %s201
      %p210 = scmp.eq.s32.totalorder %s22, 0
      %p211 = por %p209, %p210
      %p212 = scmp.ne.s32.totalorder %s200, %s201
      %p213 = scmp.eq.s32.totalorder %s23, 1
      %p214 = por %p212, %p213
      %p216 = scmp.ne.s32.totalorder %s201, %s215
      %p217 = scmp.eq.s32.totalorder %s23, 0
      %p218 = por %p216, %p217
      %s220 = sadd.s32 %s219, 1
      %p223 = scmp.eq.s32.totalorder %s17, 1
      %p224 = scmp.ne.s32.totalorder %s219, %s221
      %p225 = scmp.eq.s32.totalorder %s17, 0
      %p226 = por %p224, %p225
      %p227 = scmp.ne.s32.totalorder %s219, %s221
      %p228 = scmp.eq.s32.totalorder %s22, 1
      %p229 = por %p227, %p228
      %p230 = scmp.ne.s32.totalorder %s221, %s222
      %p231 = scmp.eq.s32.totalorder %s22, 0
      %p232 = por %p230, %p231
      %p233 = scmp.ne.s32.totalorder %s221, %s222
      %p234 = scmp.eq.s32.totalorder %s23, 1
      %p235 = por %p233, %p234
      %p237 = scmp.ne.s32.totalorder %s222, %s236
      %p238 = scmp.eq.s32.totalorder %s23, 0
      %p239 = por %p237, %p238
      %s240 = ssub.s32 %s17, %s24
      %p241 = scmp.eq.s32.totalorder %s240, 0
      %s243 = sadd.s32 %s242, 1
      %s244 = scalar_select %p241, %s242, %s243
      %p247 = pneg %p241
      %p248 = scmp.eq.s32.totalorder %s17, 1
      %p249 = por %p247, %p248
      %p250 = scmp.ne.s32.totalorder %s242, %s245
      %p251 = scmp.eq.s32.totalorder %s17, 0
      %p252 = por %p250, %p251
      %p253 = scmp.ne.s32.totalorder %s242, %s245
      %p254 = scmp.eq.s32.totalorder %s22, 1
      %p255 = por %p253, %p254
      %p256 = scmp.ne.s32.totalorder %s245, %s246
      %p257 = scmp.eq.s32.totalorder %s22, 0
      %p258 = por %p256, %p257
      %p259 = scmp.ne.s32.totalorder %s245, %s246
      %p260 = scmp.eq.s32.totalorder %s23, 1
      %p261 = por %p259, %p260
      %p263 = scmp.ne.s32.totalorder %s246, %s262
      %p264 = scmp.eq.s32.totalorder %s23, 0
      %p265 = por %p263, %p264
      %p266 = scmp.le.s32.totalorder 1, %s17
      %p267 = scmp.lt.s32.totalorder %s17, 3
      %p268 = pnand %p266, %p267
      %p269 = pneg %p268
      // Predicated region
      $region9: #{tpu_custom_call.1} parent=5 // pred_check
        _
      $region10: #{tpu_custom_call.1} parent=5 // pred_check_branch
        %271 = sbr.rel (%p268) target = $region12
      $region11: #{tpu_custom_call.1} parent=5 // pred_region
        %s272 = ssub.s32 %s17, 1
        // Predicated region
        $region13: #{tpu_custom_call.1} parent=11 // pred_check
          %p273 = pneg %p64
        $region14: #{tpu_custom_call.1} parent=11 // pred_check_branch
          %275 = sbr.rel (%p273) target = $region16
        $region15: #{tpu_custom_call.1} parent=11 // pred_region
          _
        $region16: #{tpu_custom_call.1} parent=11 // pred_fallthru
          _
        // Predicated region
        $region17: #{tpu_custom_call.1} parent=11 // pred_check
          %p276 = pneg %p85
        $region18: #{tpu_custom_call.1} parent=11 // pred_check_branch
          %278 = sbr.rel (%p276) target = $region20
        $region19: #{tpu_custom_call.1} parent=11 // pred_region
          %s280 = ssub.s32 16, 16
          %281 = vsyncadd [#allocation4], %s280
          %s283 = sshll.u32 [#allocation3], 4
          %s284 = int_to_ptr.vmem [resolvable:$true] %s283
          %286 = dma.hbm_to_vmem [thread:$0]  %s2, 16, %s284, [#allocation4]
        $region20: #{tpu_custom_call.1} parent=11 // pred_fallthru
          _
        // Predicated region
        $region21: #{tpu_custom_call.1} parent=11 // pred_check
          %p287 = pneg %p106
        $region22: #{tpu_custom_call.1} parent=11 // pred_check_branch
          %289 = sbr.rel (%p287) target = $region24
        $region23: #{tpu_custom_call.1} parent=11 // pred_region
          _
        $region24: #{tpu_custom_call.1} parent=11 // pred_fallthru
          _
        // Predicated region
        $region25: #{tpu_custom_call.1} parent=11 // pred_check
          %p290 = pneg %p127
        $region26: #{tpu_custom_call.1} parent=11 // pred_check_branch
          %292 = sbr.rel (%p290) target = $region28
        $region27: #{tpu_custom_call.1} parent=11 // pred_region
          _
        $region28: #{tpu_custom_call.1} parent=11 // pred_fallthru
          _
        // Predicated region
        $region29: #{tpu_custom_call.1} parent=11 // pred_check
          %p293 = pneg %p148
        $region30: #{tpu_custom_call.1} parent=11 // pred_check_branch
          %295 = sbr.rel (%p293) target = $region32
        $region31: #{tpu_custom_call.1} parent=11 // pred_region
          _
        $region32: #{tpu_custom_call.1} parent=11 // pred_fallthru
          _
        // Predicated region
        $region33: #{tpu_custom_call.1} parent=11 // pred_check
          %p296 = pneg %p169
        $region34: #{tpu_custom_call.1} parent=11 // pred_check_branch
          %298 = sbr.rel (%p296) target = $region36
        $region35: #{tpu_custom_call.1} parent=11 // pred_region
          _
        $region36: #{tpu_custom_call.1} parent=11 // pred_fallthru
          _
        // Predicated region
        $region37: #{tpu_custom_call.1} parent=11 // pred_check
          %p299 = pneg %p190
        $region38: #{tpu_custom_call.1} parent=11 // pred_check_branch
          %301 = sbr.rel (%p299) target = $region40
        $region39: #{tpu_custom_call.1} parent=11 // pred_region
          _
        $region40: #{tpu_custom_call.1} parent=11 // pred_fallthru
          _
        // Predicated region
        $region41: #{tpu_custom_call.1} parent=11 // pred_check
          %p302 = pneg %p211
        $region42: #{tpu_custom_call.1} parent=11 // pred_check_branch
          %304 = sbr.rel (%p302) target = $region44
        $region43: #{tpu_custom_call.1} parent=11 // pred_region
          _
        $region44: #{tpu_custom_call.1} parent=11 // pred_fallthru
          _
        // Predicated region
        $region45: #{tpu_custom_call.1} parent=11 // pred_check
          %p305 = pneg %p232
        $region46: #{tpu_custom_call.1} parent=11 // pred_check_branch
          %307 = sbr.rel (%p305) target = $region48
        $region47: #{tpu_custom_call.1} parent=11 // pred_region
          _
        $region48: #{tpu_custom_call.1} parent=11 // pred_fallthru
          _
      $region12: #{tpu_custom_call.1} parent=5 // pred_fallthru
        _
      %p308 = scmp.lt.s32.totalorder %s17, 2
      // Predicated region
      $region49: #{tpu_custom_call.1} parent=5 // pred_check
        %p309 = pneg %p308
      $region50: #{tpu_custom_call.1} parent=5 // pred_check_branch
        %311 = sbr.rel (%p309) target = $region52
      $region51: #{tpu_custom_call.1} parent=5 // pred_region
        // Predicated region
        $region53: #{tpu_custom_call.1} parent=51 // pred_check
          %p312 = pneg %p37
        $region54: #{tpu_custom_call.1} parent=51 // pred_check_branch
          %314 = sbr.rel (%p312) target = $region56
        $region55: #{tpu_custom_call.1} parent=51 // pred_region
          %p315 = scmp.lt.s32.totalorder %s17, 1
          %s316 = scalar_select %p315, %s17, 1
          %s317 = smul.addr %s316, 8
          %s318 = scalar_lea.vmem %s0, %s317
        $region56: #{tpu_custom_call.1} parent=51 // pred_fallthru
          _
      $region52: #{tpu_custom_call.1} parent=5 // pred_fallthru
        _
      %p319 = scmp.le.s32.totalorder 1, %s17
      %p320 = scmp.lt.s32.totalorder %s17, 3
      %p321 = pnand %p319, %p320
      %p322 = pneg %p321
      // Predicated region
      $region57: #{tpu_custom_call.1} parent=5 // pred_check
        _
      $region58: #{tpu_custom_call.1} parent=5 // pred_check_branch
        %324 = sbr.rel (%p321) target = $region60
      $region59: #{tpu_custom_call.1} parent=5 // pred_region
        %s325 = ssub.s32 %s17, 1
        // Predicated region
        $region61: #{tpu_custom_call.1} parent=59 // pred_check
          %p326 = pneg %p85
        $region62: #{tpu_custom_call.1} parent=59 // pred_check_branch
          %328 = sbr.rel (%p326) target = $region64
        $region63: #{tpu_custom_call.1} parent=59 // pred_region
          %329 = dma.done [#allocation4], 16
        $region64: #{tpu_custom_call.1} parent=59 // pred_fallthru
          _
        %p330 = scmp.lt.s32.totalorder %s22, 1
        %s331 = scalar_select %p330, %s22, 1
        %s332 = smul.addr %s331, 8
        %s333 = scalar_lea.vmem %s0, %s332
        %p334 = pneg %p43
        %p335 = pneg %p40
        %p336 = pneg %p64
        %p337 = pneg %p61
        %p338 = pneg %p85
        %p339 = pneg %p82
        %p340 = pneg %p106
        %p341 = pneg %p103
        %p342 = pneg %p127
        %p343 = pneg %p124
        %p344 = pneg %p148
        %p345 = pneg %p145
        %p346 = pneg %p169
        %p347 = pneg %p166
        %p348 = pneg %p190
        %p349 = pneg %p187
        %p350 = pneg %p211
        %p351 = pneg %p208
        %p352 = pneg %p232
        %p353 = pneg %p229
        %p354 = pneg %p258
        %p355 = pneg %p255
        %p356 = scmp.lt.s32.totalorder %s22, 1
        %s357 = scalar_select %p356, %s22, 1
        %s358 = smul.addr %s357, 4
        %s359 = smul.addr %s358, 8
        %s360 = scalar_lea.vmem %s10, %s359
        %p361 = scmp.lt.s32.totalorder %s22, 1
        %s362 = scalar_select %p361, %s22, 1
        %s363 = smul.addr %s362, 8
        %s364 = scalar_lea.vmem %s0, %s363
        %p365 = scmp.lt.s32.totalorder %s22, 1
        %s366 = scalar_select %p365, %s22, 1
        %s367 = smul.addr %s366, 4
        %s368 = smul.addr %s367, 8
        %s369 = scalar_lea.vmem %s10, %s368
        %v370 = vld [vmem:[%s364] sm:$0xff]
        %v371 = vld [vmem:[%s1] sm:$0xff]
        %v372 = vld [vmem:[%s1 + $0x8] sm:$0xff]
        %v373 = vld [vmem:[%s1 + $0x10] sm:$0xff]
        %v374 = vld [vmem:[%s1 + $0x18] sm:$0xff]
        %v375 = vld [vmem:[#allocation3] sm:$0x1]
        %v377 = vlaneseq
        %v378 = vshrl.u32 %v377, 7
        %v379 = vsub.s32 0, %v378
        %v380 = vrot.slane %v375, %v379
        %vm382 = vcmask 261120
        %v384 = vsel %vm382, %v370, 0
        %386 = vmatprep.subr.mxu0 0.0
        %387 = vmatpush1.msra.mxu0 %v371
        %388 = vmatprep.subr.mxu0 0.0
        %389 = vmatpush1.msra.mxu0 %v372
        %390 = vmatprep.subr.mxu0 0.0
        %391 = vmatpush1.msra.mxu0 %v373
        %392 = vmatprep.subr.mxu0 0.0
        %393 = vmatpush1.msra.mxu0 %v374
        %394 = vmatprep.subr.mxu0 0.0
        %395 = vmatpush1.msra.mxu0 0.0
        %396 = vmatprep.subr.mxu0 0.0
        %397 = vmatpush1.msra.mxu0 0.0
        %398 = vmatprep.subr.mxu0 0.0
        %399 = vmatpush1.msra.mxu0 0.0
        %400 = vmatprep.subr.mxu0 0.0
        %401 = vmatpush1.msra.mxu0 0.0
        %402 = vmatprep.subr.mxu0 0.0
        %403 = vmatpush1.msra.mxu0 0.0
        %404 = vmatprep.subr.mxu0 0.0
        %405 = vmatpush1.msra.mxu0 0.0
        %406 = vmatprep.subr.mxu0 0.0
        %407 = vmatpush1.msra.mxu0 0.0
        %408 = vmatprep.subr.mxu0 0.0
        %409 = vmatpush1.msra.mxu0 0.0
        %410 = vmatprep.subr.mxu0 0.0
        %411 = vmatpush1.msra.mxu0 0.0
        %412 = vmatprep.subr.mxu0 0.0
        %413 = vmatpush1.msra.mxu0 0.0
        %414 = vmatprep.subr.mxu0 0.0
        %415 = vmatpush1.msra.mxu0 0.0
        %416 = vmatprep.subr.mxu0 0.0
        %417 = vmatpush1.msra.mxu0 0.0
        %418 = vmatprep.subr.mxu0 0.0
        %419 = vmatpush1.msra.mxu0 0.0
        %420 = vmatprep.subr.mxu0 0.0
        %421 = vmatpush1.msra.mxu0 0.0
        %422 = vmatprep.subr.mxu0 0.0
        %423 = vmatpush1.msra.mxu0 0.0
        %424 = vmatprep.subr.mxu0 0.0
        %425 = vmatpush1.msra.mxu0 0.0
        %426 = vmatprep.subr.mxu0 0.0
        %427 = vmatpush1.msra.mxu0 0.0
        %428 = vmatprep.subr.mxu0 0.0
        %429 = vmatpush1.msra.mxu0 0.0
        %430 = vmatprep.subr.mxu0 0.0
        %431 = vmatpush1.msra.mxu0 0.0
        %432 = vmatprep.subr.mxu0 0.0
        %433 = vmatpush1.msra.mxu0 0.0
        %434 = vmatprep.subr.mxu0 0.0
        %435 = vmatpush1.msra.mxu0 0.0
        %436 = vmatprep.subr.mxu0 0.0
        %437 = vmatpush1.msra.mxu0 0.0
        %438 = vmatprep.subr.mxu0 0.0
        %439 = vmatpush1.msra.mxu0 0.0
        %440 = vmatprep.subr.mxu0 0.0
        %441 = vmatpush1.msra.mxu0 0.0
        %442 = vmatprep.subr.mxu0 0.0
        %443 = vmatpush1.msra.mxu0 0.0
        %444 = vmatprep.subr.mxu0 0.0
        %445 = vmatpush1.msra.mxu0 0.0
        %446 = vmatprep.subr.mxu0 0.0
        %447 = vmatpush1.msra.mxu0 0.0
        %448 = vmatprep.subr.mxu0 0.0
        %449 = vmatpush1.msra.mxu0 0.0
        %450 = vmatprep.mubr.f32.mxu0 0.0
        %451 = vmatmul.mubr.f32.gmra.mrb[0].mxu0 %v384
        %v452 = vpop.f32.mrb[0].mxu0
        %v453 = vadd.f32 %v380, %v452
        %v454 = vpop.f32.mrb[0].mxu0
        %455 = vdwg.mxu0
        %vm456 = vcmask 785408
        %457 = vst.msk [vmem:[#allocation2] sm:$0xff] %vm456, %v453
        %v458 = vld [vmem:[%s6] sm:$0xff]
        %v459 = vld [vmem:[%s6 + $0x8] sm:$0xff]
        %v460 = vld [vmem:[%s6 + $0x10] sm:$0xff]
        %v461 = vld [vmem:[%s6 + $0x18] sm:$0xff]
        %v462 = vld [vmem:[%s7] sm:$0xf]
        %v463 = vld [vmem:[%s8] sm:$0xf]
        %v464 = vld [vmem:[%s9] sm:$0xff]
        %v465 = vld [vmem:[%s9 + $0x8] sm:$0xff]
        %v466 = vld [vmem:[%s9 + $0x10] sm:$0xff]
        %v467 = vld [vmem:[%s9 + $0x18] sm:$0xff]
        %v468 = vld [vmem:[%s3] sm:$0xff]
        %v469 = vld [vmem:[%s4] sm:$0xff]
        %v470 = vld [vmem:[%s5] sm:$0xff]
        %v471 = vld [vmem:[#allocation2] sm:$0xff]
        %v472 = vmul.f32 %v471, %v468
        %vm473 = vcmask 1047808
        %474 = vrot.lane.b32.xlu0 %v471, 32
        %v475 = vpop.permute.xlu0 %474
        %v476 = vsel %vm473, %v475, %v471
        %477 = vrot.lane.b32.xlu0 %v476, 32
        %v478 = vpop.permute.xlu0 %477
        %v479 = vsel %vm473, %v478, %v471
        %481 = vrot.lane.b32.xlu0 %v469, 1
        %v482 = vpop.permute.xlu0 %481
        %v484 = vmul.f32 %v479, %v482
        %486 = vrot.lane.b32.xlu0 %v484, 127
        %v487 = vpop.permute.xlu0 %486
        %v489 = vadd.f32 %v472, %v487
        %491 = vrot.lane.b32.xlu0 %v470, 31
        %v492 = vpop.permute.xlu0 %491
        %v494 = vmul.f32 %v479, %v492
        %496 = vrot.lane.b32.xlu0 %v494, 97
        %v497 = vpop.permute.xlu0 %496
        %v499 = vadd.f32 %v489, %v497
        %v500 = vmax.f32 %v499, 0.0
        %v501 = vld [vmem:[#allocation2] sm:$0xff]
        %v502 = vld [vmem:[%s3] sm:$0xff]
        %v503 = vld [vmem:[%s4] sm:$0xff]
        %v504 = vld [vmem:[%s5] sm:$0xff]
        %506 = vrot.lane.b32.xlu0 %v502, 32
        %v507 = vpop.permute.xlu0 %506
        %v509 = vmul.f32 %v501, %v507
        %511 = vrot.lane.b32.xlu0 %v501, 96
        %v512 = vpop.permute.xlu0 %511
        %514 = vrot.lane.b32.xlu0 %v512, 32
        %v515 = vpop.permute.xlu0 %514
        %v516 = vsel %vm473, %v515, %v512
        %517 = vrot.lane.b32.xlu0 %v516, 32
        %v518 = vpop.permute.xlu0 %517
        %v519 = vsel %vm473, %v518, %v512
        %521 = vrot.lane.b32.xlu0 %v503, 1
        %v522 = vpop.permute.xlu0 %521
        %v524 = vmul.f32 %v519, %v522
        %526 = vrot.lane.b32.xlu0 %v524, 31
        %v527 = vpop.permute.xlu0 %526
        %v529 = vadd.f32 %v509, %v527
        %531 = vrot.lane.b32.xlu0 %v504, 31
        %v532 = vpop.permute.xlu0 %531
        %v534 = vmul.f32 %v519, %v532
        %536 = vrot.lane.b32.xlu0 %v534, 1
        %v537 = vpop.permute.xlu0 %536
        %v539 = vadd.f32 %v529, %v537
        %v540 = vmax.f32 %v539, 0.0
        %v541 = vmax.f32 %v501, 0.0
        %543 = vrot.lane.b32.xlu0 %v540, 96
        %v544 = vpop.permute.xlu0 %543
        %v546 = vsel %vm382, %v500, 0
        %v548 = vsel %vm382, %v544, 0
        %550 = vmatprep.subr.mxu0 0.0
        %551 = vmatpush1.xpose.msra.mxu0 %v548
        %552 = vmatprep.subr.mxu0 0.0
        %553 = vmatpush1.xpose.msra.mxu0 0.0
        %554 = vmatprep.subr.mxu0 0.0
        %555 = vmatpush1.xpose.msra.mxu0 0.0
        %556 = vmatprep.subr.mxu0 0.0
        %557 = vmatpush1.xpose.msra.mxu0 0.0
        %558 = vmatprep.subr.mxu0 0.0
        %559 = vmatpush1.xpose.msra.mxu0 0.0
        %560 = vmatprep.subr.mxu0 0.0
        %561 = vmatpush1.xpose.msra.mxu0 0.0
        %562 = vmatprep.subr.mxu0 0.0
        %563 = vmatpush1.xpose.msra.mxu0 0.0
        %564 = vmatprep.subr.mxu0 0.0
        %565 = vmatpush1.xpose.msra.mxu0 0.0
        %566 = vmatprep.subr.mxu0 0.0
        %567 = vmatpush1.xpose.msra.mxu0 0.0
        %568 = vmatprep.subr.mxu0 0.0
        %569 = vmatpush1.xpose.msra.mxu0 0.0
        %570 = vmatprep.subr.mxu0 0.0
        %571 = vmatpush1.xpose.msra.mxu0 0.0
        %572 = vmatprep.subr.mxu0 0.0
        %573 = vmatpush1.xpose.msra.mxu0 0.0
        %574 = vmatprep.subr.mxu0 0.0
        %575 = vmatpush1.xpose.msra.mxu0 0.0
        %576 = vmatprep.subr.mxu0 0.0
        %577 = vmatpush1.xpose.msra.mxu0 0.0
        %578 = vmatprep.subr.mxu0 0.0
        %579 = vmatpush1.xpose.msra.mxu0 0.0
        %580 = vmatprep.subr.mxu0 0.0
        %581 = vmatpush1.xpose.msra.mxu0 0.0
        %582 = vmatprep.subr.mxu0 0.0
        %583 = vmatpush1.xpose.msra.mxu0 0.0
        %584 = vmatprep.subr.mxu0 0.0
        %585 = vmatpush1.xpose.msra.mxu0 0.0
        %586 = vmatprep.subr.mxu0 0.0
        %587 = vmatpush1.xpose.msra.mxu0 0.0
        %588 = vmatprep.subr.mxu0 0.0
        %589 = vmatpush1.xpose.msra.mxu0 0.0
        %590 = vmatprep.subr.mxu0 0.0
        %591 = vmatpush1.xpose.msra.mxu0 0.0
        %592 = vmatprep.subr.mxu0 0.0
        %593 = vmatpush1.xpose.msra.mxu0 0.0
        %594 = vmatprep.subr.mxu0 0.0
        %595 = vmatpush1.xpose.msra.mxu0 0.0
        %596 = vmatprep.subr.mxu0 0.0
        %597 = vmatpush1.xpose.msra.mxu0 0.0
        %598 = vmatprep.subr.mxu0 0.0
        %599 = vmatpush1.xpose.msra.mxu0 0.0
        %600 = vmatprep.subr.mxu0 0.0
        %601 = vmatpush1.xpose.msra.mxu0 0.0
        %602 = vmatprep.subr.mxu0 0.0
        %603 = vmatpush1.xpose.msra.mxu0 0.0
        %604 = vmatprep.subr.mxu0 0.0
        %605 = vmatpush1.xpose.msra.mxu0 0.0
        %606 = vmatprep.subr.mxu0 0.0
        %607 = vmatpush1.xpose.msra.mxu0 0.0
        %608 = vmatprep.subr.mxu0 0.0
        %609 = vmatpush1.xpose.msra.mxu0 0.0
        %610 = vmatprep.subr.mxu0 0.0
        %611 = vmatpush1.xpose.msra.mxu0 0.0
        %612 = vmatprep.subr.mxu0 0.0
        %613 = vmatpush1.xpose.msra.mxu0 0.0
        %614 = vmatprep.mubr.f32.mxu0 0.0
        %615 = vmatmul.mubr.f32.gmra.mrb[0].mxu0 %v546
        %v616 = vpop.f32.mrb[0].mxu0
        %v617 = vadd.f32 0.0, %v616
        %v618 = vpop.f32.mrb[0].mxu0
        %619 = vdwg.mxu0
        %621 = vrot.lane.b32.xlu0 %v541, 64
        %v622 = vpop.permute.xlu0 %621
        %vm624 = vcmask 64512
        %v626 = vsel %vm624, %v617, 0
        %628 = vmatprep.subr.mxu0 0.0
        %629 = vmatpush1.msra.mxu0 %v622
        %630 = vmatprep.subr.mxu0 0.0
        %631 = vmatpush1.msra.mxu0 0.0
        %632 = vmatprep.subr.mxu0 0.0
        %633 = vmatpush1.msra.mxu0 0.0
        %634 = vmatprep.subr.mxu0 0.0
        %635 = vmatpush1.msra.mxu0 0.0
        %636 = vmatprep.subr.mxu0 0.0
        %637 = vmatpush1.msra.mxu0 0.0
        %638 = vmatprep.subr.mxu0 0.0
        %639 = vmatpush1.msra.mxu0 0.0
        %640 = vmatprep.subr.mxu0 0.0
        %641 = vmatpush1.msra.mxu0 0.0
        %642 = vmatprep.subr.mxu0 0.0
        %643 = vmatpush1.msra.mxu0 0.0
        %644 = vmatprep.subr.mxu0 0.0
        %645 = vmatpush1.msra.mxu0 0.0
        %646 = vmatprep.subr.mxu0 0.0
        %647 = vmatpush1.msra.mxu0 0.0
        %648 = vmatprep.subr.mxu0 0.0
        %649 = vmatpush1.msra.mxu0 0.0
        %650 = vmatprep.subr.mxu0 0.0
        %651 = vmatpush1.msra.mxu0 0.0
        %652 = vmatprep.subr.mxu0 0.0
        %653 = vmatpush1.msra.mxu0 0.0
        %654 = vmatprep.subr.mxu0 0.0
        %655 = vmatpush1.msra.mxu0 0.0
        %656 = vmatprep.subr.mxu0 0.0
        %657 = vmatpush1.msra.mxu0 0.0
        %658 = vmatprep.subr.mxu0 0.0
        %659 = vmatpush1.msra.mxu0 0.0
        %660 = vmatprep.subr.mxu0 0.0
        %661 = vmatpush1.msra.mxu0 0.0
        %662 = vmatprep.subr.mxu0 0.0
        %663 = vmatpush1.msra.mxu0 0.0
        %664 = vmatprep.subr.mxu0 0.0
        %665 = vmatpush1.msra.mxu0 0.0
        %666 = vmatprep.subr.mxu0 0.0
        %667 = vmatpush1.msra.mxu0 0.0
        %668 = vmatprep.subr.mxu0 0.0
        %669 = vmatpush1.msra.mxu0 0.0
        %670 = vmatprep.subr.mxu0 0.0
        %671 = vmatpush1.msra.mxu0 0.0
        %672 = vmatprep.subr.mxu0 0.0
        %673 = vmatpush1.msra.mxu0 0.0
        %674 = vmatprep.subr.mxu0 0.0
        %675 = vmatpush1.msra.mxu0 0.0
        %676 = vmatprep.subr.mxu0 0.0
        %677 = vmatpush1.msra.mxu0 0.0
        %678 = vmatprep.subr.mxu0 0.0
        %679 = vmatpush1.msra.mxu0 0.0
        %680 = vmatprep.subr.mxu0 0.0
        %681 = vmatpush1.msra.mxu0 0.0
        %682 = vmatprep.subr.mxu0 0.0
        %683 = vmatpush1.msra.mxu0 0.0
        %684 = vmatprep.subr.mxu0 0.0
        %685 = vmatpush1.msra.mxu0 0.0
        %686 = vmatprep.subr.mxu0 0.0
        %687 = vmatpush1.msra.mxu0 0.0
        %688 = vmatprep.subr.mxu0 0.0
        %689 = vmatpush1.msra.mxu0 0.0
        %690 = vmatprep.subr.mxu0 0.0
        %691 = vmatpush1.msra.mxu0 0.0
        %692 = vmatprep.mubr.f32.mxu0 0.0
        %693 = vmatmul.mubr.f32.gmra.mrb[0].mxu0 %v626
        %v694 = vpop.f32.mrb[0].mxu0
        %v695 = vadd.f32 0.0, %v694
        %v696 = vpop.f32.mrb[0].mxu0
        %697 = vdwg.mxu0
        %v699 = vsel %vm382, %v695, 0
        %701 = vmatprep.subr.mxu0 0.0
        %702 = vmatpush1.msra.mxu0 %v458
        %703 = vmatprep.subr.mxu0 0.0
        %704 = vmatpush1.msra.mxu0 %v459
        %705 = vmatprep.subr.mxu0 0.0
        %706 = vmatpush1.msra.mxu0 %v460
        %707 = vmatprep.subr.mxu0 0.0
        %708 = vmatpush1.msra.mxu0 %v461
        %709 = vmatprep.subr.mxu0 0.0
        %710 = vmatpush1.msra.mxu0 0.0
        %711 = vmatprep.subr.mxu0 0.0
        %712 = vmatpush1.msra.mxu0 0.0
        %713 = vmatprep.subr.mxu0 0.0
        %714 = vmatpush1.msra.mxu0 0.0
        %715 = vmatprep.subr.mxu0 0.0
        %716 = vmatpush1.msra.mxu0 0.0
        %717 = vmatprep.subr.mxu0 0.0
        %718 = vmatpush1.msra.mxu0 0.0
        %719 = vmatprep.subr.mxu0 0.0
        %720 = vmatpush1.msra.mxu0 0.0
        %721 = vmatprep.subr.mxu0 0.0
        %722 = vmatpush1.msra.mxu0 0.0
        %723 = vmatprep.subr.mxu0 0.0
        %724 = vmatpush1.msra.mxu0 0.0
        %725 = vmatprep.subr.mxu0 0.0
        %726 = vmatpush1.msra.mxu0 0.0
        %727 = vmatprep.subr.mxu0 0.0
        %728 = vmatpush1.msra.mxu0 0.0
        %729 = vmatprep.subr.mxu0 0.0
        %730 = vmatpush1.msra.mxu0 0.0
        %731 = vmatprep.subr.mxu0 0.0
        %732 = vmatpush1.msra.mxu0 0.0
        %733 = vmatprep.subr.mxu0 0.0
        %734 = vmatpush1.msra.mxu0 0.0
        %735 = vmatprep.subr.mxu0 0.0
        %736 = vmatpush1.msra.mxu0 0.0
        %737 = vmatprep.subr.mxu0 0.0
        %738 = vmatpush1.msra.mxu0 0.0
        %739 = vmatprep.subr.mxu0 0.0
        %740 = vmatpush1.msra.mxu0 0.0
        %741 = vmatprep.subr.mxu0 0.0
        %742 = vmatpush1.msra.mxu0 0.0
        %743 = vmatprep.subr.mxu0 0.0
        %744 = vmatpush1.msra.mxu0 0.0
        %745 = vmatprep.subr.mxu0 0.0
        %746 = vmatpush1.msra.mxu0 0.0
        %747 = vmatprep.subr.mxu0 0.0
        %748 = vmatpush1.msra.mxu0 0.0
        %749 = vmatprep.subr.mxu0 0.0
        %750 = vmatpush1.msra.mxu0 0.0
        %751 = vmatprep.subr.mxu0 0.0
        %752 = vmatpush1.msra.mxu0 0.0
        %753 = vmatprep.subr.mxu0 0.0
        %754 = vmatpush1.msra.mxu0 0.0
        %755 = vmatprep.subr.mxu0 0.0
        %756 = vmatpush1.msra.mxu0 0.0
        %757 = vmatprep.subr.mxu0 0.0
        %758 = vmatpush1.msra.mxu0 0.0
        %759 = vmatprep.subr.mxu0 0.0
        %760 = vmatpush1.msra.mxu0 0.0
        %761 = vmatprep.subr.mxu0 0.0
        %762 = vmatpush1.msra.mxu0 0.0
        %763 = vmatprep.subr.mxu0 0.0
        %764 = vmatpush1.msra.mxu0 0.0
        %765 = vmatprep.mubr.f32.mxu0 0.0
        %766 = vmatmul.mubr.f32.gmra.mrb[0].mxu0 %v699
        %v767 = vpop.f32.mrb[0].mxu0
        %v768 = vadd.f32 0.0, %v767
        %v769 = vpop.f32.mrb[0].mxu0
        %770 = vdwg.mxu0
        %vm771 = vcmask 31744
        %v773 = vsel %vm771, %v768, 0
        %vm775 = vcmask 1043456
        %v777 = vsel %vm775, %v462, 0
        %779 = vmatprep.subr.mxu0 0.0
        %780 = vmatpush1.msra.mxu0 %v777
        %781 = vmatprep.subr.mxu0 0.0
        %782 = vmatpush1.msra.mxu0 0.0
        %783 = vmatprep.subr.mxu0 0.0
        %784 = vmatpush1.msra.mxu0 0.0
        %785 = vmatprep.subr.mxu0 0.0
        %786 = vmatpush1.msra.mxu0 0.0
        %787 = vmatprep.subr.mxu0 0.0
        %788 = vmatpush1.msra.mxu0 0.0
        %789 = vmatprep.subr.mxu0 0.0
        %790 = vmatpush1.msra.mxu0 0.0
        %791 = vmatprep.subr.mxu0 0.0
        %792 = vmatpush1.msra.mxu0 0.0
        %793 = vmatprep.subr.mxu0 0.0
        %794 = vmatpush1.msra.mxu0 0.0
        %795 = vmatprep.subr.mxu0 0.0
        %796 = vmatpush1.msra.mxu0 0.0
        %797 = vmatprep.subr.mxu0 0.0
        %798 = vmatpush1.msra.mxu0 0.0
        %799 = vmatprep.subr.mxu0 0.0
        %800 = vmatpush1.msra.mxu0 0.0
        %801 = vmatprep.subr.mxu0 0.0
        %802 = vmatpush1.msra.mxu0 0.0
        %803 = vmatprep.subr.mxu0 0.0
        %804 = vmatpush1.msra.mxu0 0.0
        %805 = vmatprep.subr.mxu0 0.0
        %806 = vmatpush1.msra.mxu0 0.0
        %807 = vmatprep.subr.mxu0 0.0
        %808 = vmatpush1.msra.mxu0 0.0
        %809 = vmatprep.subr.mxu0 0.0
        %810 = vmatpush1.msra.mxu0 0.0
        %811 = vmatprep.subr.mxu0 0.0
        %812 = vmatpush1.msra.mxu0 0.0
        %813 = vmatprep.subr.mxu0 0.0
        %814 = vmatpush1.msra.mxu0 0.0
        %815 = vmatprep.subr.mxu0 0.0
        %816 = vmatpush1.msra.mxu0 0.0
        %817 = vmatprep.subr.mxu0 0.0
        %818 = vmatpush1.msra.mxu0 0.0
        %819 = vmatprep.subr.mxu0 0.0
        %820 = vmatpush1.msra.mxu0 0.0
        %821 = vmatprep.subr.mxu0 0.0
        %822 = vmatpush1.msra.mxu0 0.0
        %823 = vmatprep.subr.mxu0 0.0
        %824 = vmatpush1.msra.mxu0 0.0
        %825 = vmatprep.subr.mxu0 0.0
        %826 = vmatpush1.msra.mxu0 0.0
        %827 = vmatprep.subr.mxu0 0.0
        %828 = vmatpush1.msra.mxu0 0.0
        %829 = vmatprep.subr.mxu0 0.0
        %830 = vmatpush1.msra.mxu0 0.0
        %831 = vmatprep.subr.mxu0 0.0
        %832 = vmatpush1.msra.mxu0 0.0
        %833 = vmatprep.subr.mxu0 0.0
        %834 = vmatpush1.msra.mxu0 0.0
        %835 = vmatprep.subr.mxu0 0.0
        %836 = vmatpush1.msra.mxu0 0.0
        %837 = vmatprep.subr.mxu0 0.0
        %838 = vmatpush1.msra.mxu0 0.0
        %839 = vmatprep.subr.mxu0 0.0
        %840 = vmatpush1.msra.mxu0 0.0
        %841 = vmatprep.subr.mxu0 0.0
        %842 = vmatpush1.msra.mxu0 0.0
        %843 = vmatprep.mubr.f32.mxu0 0.0
        %844 = vmatmul.mubr.f32.gmra.mrb[0].mxu0 %v773
        %v845 = vpop.f32.mrb[0].mxu0
        %v846 = vadd.f32 0.0, %v845
        %v847 = vpop.f32.mrb[0].mxu0
        %848 = vdwg.mxu0
        %v849 = vsub.f32 %v695, %v846
        %v850 = vmul.f32 %v849, %v849
        %v852 = vsel %vm382, %v850, 0
        %854 = vmatprep.subr.mxu0 0.0
        %855 = vmatpush1.msra.mxu0 %v458
        %856 = vmatprep.subr.mxu0 0.0
        %857 = vmatpush1.msra.mxu0 %v459
        %858 = vmatprep.subr.mxu0 0.0
        %859 = vmatpush1.msra.mxu0 %v460
        %860 = vmatprep.subr.mxu0 0.0
        %861 = vmatpush1.msra.mxu0 %v461
        %862 = vmatprep.subr.mxu0 0.0
        %863 = vmatpush1.msra.mxu0 0.0
        %864 = vmatprep.subr.mxu0 0.0
        %865 = vmatpush1.msra.mxu0 0.0
        %866 = vmatprep.subr.mxu0 0.0
        %867 = vmatpush1.msra.mxu0 0.0
        %868 = vmatprep.subr.mxu0 0.0
        %869 = vmatpush1.msra.mxu0 0.0
        %870 = vmatprep.subr.mxu0 0.0
        %871 = vmatpush1.msra.mxu0 0.0
        %872 = vmatprep.subr.mxu0 0.0
        %873 = vmatpush1.msra.mxu0 0.0
        %874 = vmatprep.subr.mxu0 0.0
        %875 = vmatpush1.msra.mxu0 0.0
        %876 = vmatprep.subr.mxu0 0.0
        %877 = vmatpush1.msra.mxu0 0.0
        %878 = vmatprep.subr.mxu0 0.0
        %879 = vmatpush1.msra.mxu0 0.0
        %880 = vmatprep.subr.mxu0 0.0
        %881 = vmatpush1.msra.mxu0 0.0
        %882 = vmatprep.subr.mxu0 0.0
        %883 = vmatpush1.msra.mxu0 0.0
        %884 = vmatprep.subr.mxu0 0.0
        %885 = vmatpush1.msra.mxu0 0.0
        %886 = vmatprep.subr.mxu0 0.0
        %887 = vmatpush1.msra.mxu0 0.0
        %888 = vmatprep.subr.mxu0 0.0
        %889 = vmatpush1.msra.mxu0 0.0
        %890 = vmatprep.subr.mxu0 0.0
        %891 = vmatpush1.msra.mxu0 0.0
        %892 = vmatprep.subr.mxu0 0.0
        %893 = vmatpush1.msra.mxu0 0.0
        %894 = vmatprep.subr.mxu0 0.0
        %895 = vmatpush1.msra.mxu0 0.0
        %896 = vmatprep.subr.mxu0 0.0
        %897 = vmatpush1.msra.mxu0 0.0
        %898 = vmatprep.subr.mxu0 0.0
        %899 = vmatpush1.msra.mxu0 0.0
        %900 = vmatprep.subr.mxu0 0.0
        %901 = vmatpush1.msra.mxu0 0.0
        %902 = vmatprep.subr.mxu0 0.0
        %903 = vmatpush1.msra.mxu0 0.0
        %904 = vmatprep.subr.mxu0 0.0
        %905 = vmatpush1.msra.mxu0 0.0
        %906 = vmatprep.subr.mxu0 0.0
        %907 = vmatpush1.msra.mxu0 0.0
        %908 = vmatprep.subr.mxu0 0.0
        %909 = vmatpush1.msra.mxu0 0.0
        %910 = vmatprep.subr.mxu0 0.0
        %911 = vmatpush1.msra.mxu0 0.0
        %912 = vmatprep.subr.mxu0 0.0
        %913 = vmatpush1.msra.mxu0 0.0
        %914 = vmatprep.subr.mxu0 0.0
        %915 = vmatpush1.msra.mxu0 0.0
        %916 = vmatprep.subr.mxu0 0.0
        %917 = vmatpush1.msra.mxu0 0.0
        %918 = vmatprep.mubr.f32.mxu0 0.0
        %919 = vmatmul.mubr.f32.gmra.mrb[0].mxu0 %v852
        %v920 = vpop.f32.mrb[0].mxu0
        %v921 = vadd.f32 1e-05, %v920
        %v922 = vpop.f32.mrb[0].mxu0
        %923 = vdwg.mxu0
        %v924 = vrsqrt.pop %v921
        %v926 = vsel %vm771, %v924, 0
        %v929 = vsel %vm775, %v463, 0
        %931 = vmatprep.subr.mxu0 0.0
        %932 = vmatpush1.msra.mxu0 %v929
        %933 = vmatprep.subr.mxu0 0.0
        %934 = vmatpush1.msra.mxu0 0.0
        %935 = vmatprep.subr.mxu0 0.0
        %936 = vmatpush1.msra.mxu0 0.0
        %937 = vmatprep.subr.mxu0 0.0
        %938 = vmatpush1.msra.mxu0 0.0
        %939 = vmatprep.subr.mxu0 0.0
        %940 = vmatpush1.msra.mxu0 0.0
        %941 = vmatprep.subr.mxu0 0.0
        %942 = vmatpush1.msra.mxu0 0.0
        %943 = vmatprep.subr.mxu0 0.0
        %944 = vmatpush1.msra.mxu0 0.0
        %945 = vmatprep.subr.mxu0 0.0
        %946 = vmatpush1.msra.mxu0 0.0
        %947 = vmatprep.subr.mxu0 0.0
        %948 = vmatpush1.msra.mxu0 0.0
        %949 = vmatprep.subr.mxu0 0.0
        %950 = vmatpush1.msra.mxu0 0.0
        %951 = vmatprep.subr.mxu0 0.0
        %952 = vmatpush1.msra.mxu0 0.0
        %953 = vmatprep.subr.mxu0 0.0
        %954 = vmatpush1.msra.mxu0 0.0
        %955 = vmatprep.subr.mxu0 0.0
        %956 = vmatpush1.msra.mxu0 0.0
        %957 = vmatprep.subr.mxu0 0.0
        %958 = vmatpush1.msra.mxu0 0.0
        %959 = vmatprep.subr.mxu0 0.0
        %960 = vmatpush1.msra.mxu0 0.0
        %961 = vmatprep.subr.mxu0 0.0
        %962 = vmatpush1.msra.mxu0 0.0
        %963 = vmatprep.subr.mxu0 0.0
        %964 = vmatpush1.msra.mxu0 0.0
        %965 = vmatprep.subr.mxu0 0.0
        %966 = vmatpush1.msra.mxu0 0.0
        %967 = vmatprep.subr.mxu0 0.0
        %968 = vmatpush1.msra.mxu0 0.0
        %969 = vmatprep.subr.mxu0 0.0
        %970 = vmatpush1.msra.mxu0 0.0
        %971 = vmatprep.subr.mxu0 0.0
        %972 = vmatpush1.msra.mxu0 0.0
        %973 = vmatprep.subr.mxu0 0.0
        %974 = vmatpush1.msra.mxu0 0.0
        %975 = vmatprep.subr.mxu0 0.0
        %976 = vmatpush1.msra.mxu0 0.0
        %977 = vmatprep.subr.mxu0 0.0
        %978 = vmatpush1.msra.mxu0 0.0
        %979 = vmatprep.subr.mxu0 0.0
        %980 = vmatpush1.msra.mxu0 0.0
        %981 = vmatprep.subr.mxu0 0.0
        %982 = vmatpush1.msra.mxu0 0.0
        %983 = vmatprep.subr.mxu0 0.0
        %984 = vmatpush1.msra.mxu0 0.0
        %985 = vmatprep.subr.mxu0 0.0
        %986 = vmatpush1.msra.mxu0 0.0
        %987 = vmatprep.subr.mxu0 0.0
        %988 = vmatpush1.msra.mxu0 0.0
        %989 = vmatprep.subr.mxu0 0.0
        %990 = vmatpush1.msra.mxu0 0.0
        %991 = vmatprep.subr.mxu0 0.0
        %992 = vmatpush1.msra.mxu0 0.0
        %993 = vmatprep.subr.mxu0 0.0
        %994 = vmatpush1.msra.mxu0 0.0
        %995 = vmatprep.mubr.f32.mxu0 0.0
        %996 = vmatmul.mubr.f32.gmra.mrb[0].mxu0 %v926
        %v997 = vpop.f32.mrb[0].mxu0
        %v998 = vadd.f32 0.0, %v997
        %v999 = vpop.f32.mrb[0].mxu0
        %1000 = vdwg.mxu0
        %v1001 = vmul.f32 %v849, %v998
        %1002 = vxpose.xlu0.b32.start [1/16] %v1001, 128
        %1003 = vxpose.xlu0.b32.cont [2/16] 0.0, 128
        %1004 = vxpose.xlu0.b32.cont [3/16] 0.0, 128
        %1005 = vxpose.xlu0.b32.cont [4/16] 0.0, 128
        %1006 = vxpose.xlu0.b32.cont [5/16] 0.0, 128
        %1007 = vxpose.xlu0.b32.cont [6/16] 0.0, 128
        %1008 = vxpose.xlu0.b32.cont [7/16] 0.0, 128
        %1009 = vxpose.xlu0.b32.cont [8/16] 0.0, 128
        %1010 = vxpose.xlu0.b32.cont [9/16] 0.0, 128
        %1011 = vxpose.xlu0.b32.cont [10/16] 0.0, 128
        %1012 = vxpose.xlu0.b32.cont [11/16] 0.0, 128
        %1013 = vxpose.xlu0.b32.cont [12/16] 0.0, 128
        %1014 = vxpose.xlu0.b32.cont [13/16] 0.0, 128
        %1015 = vxpose.xlu0.b32.cont [14/16] 0.0, 128
        %1016 = vxpose.xlu0.b32.cont [15/16] 0.0, 128
        %1017 = vxpose.xlu0.b32.end [16/16] 0.0, 128
        %v1018 = vpop.trf.xlu0
        %v1019 = vpop.trf.xlu0
        %v1020 = vpop.trf.xlu0
        %v1021 = vpop.trf.xlu0
        %v1022 = vpop.trf.xlu0
        %v1023 = vpop.trf.xlu0
        %v1024 = vpop.trf.xlu0
        %v1025 = vpop.trf.xlu0
        %v1026 = vpop.trf.xlu0
        %v1027 = vpop.trf.xlu0
        %v1028 = vpop.trf.xlu0
        %v1029 = vpop.trf.xlu0
        %v1030 = vpop.trf.xlu0
        %v1031 = vpop.trf.xlu0
        %v1032 = vpop.trf.xlu0
        %v1033 = vpop.trf.xlu0
        %1035 = vset.pattern.permute.xlu0 0
        %1036 = vperm.xlu0 %1035, %v464
        %v1037 = vpop.permute.xlu0 %1036
        %1040 = vset.pattern.permute.xlu0 0
        %1041 = vperm.xlu0 %1040, %v465
        %v1042 = vpop.permute.xlu0 %1041
        %1045 = vset.pattern.permute.xlu0 0
        %1046 = vperm.xlu0 %1045, %v466
        %v1047 = vpop.permute.xlu0 %1046
        %1050 = vset.pattern.permute.xlu0 0
        %1051 = vperm.xlu0 %1050, %v467
        %v1052 = vpop.permute.xlu0 %1051
        %v1054 = vadd.f32 %v1018, %v1037
        %v1055 = vadd.f32 %v1019, %v1042
        %v1056 = vadd.f32 %v1020, %v1047
        %v1057 = vadd.f32 %v1021, %v1052
        %1058 = vst.msk [vmem:[%s369] sm:$0xff] %vm624, %v1054
        %1059 = vst.msk [vmem:[%s369 + $0x8] sm:$0xff] %vm624, %v1055
        %1060 = vst.msk [vmem:[%s369 + $0x10] sm:$0xff] %vm624, %v1056
        %1061 = vst.msk [vmem:[%s369 + $0x18] sm:$0xff] %vm624, %v1057
        %p1062 = scmp.lt.s32.totalorder %s22, 1
        %s1063 = scalar_select %p1062, %s22, 1
        %s1064 = smul.addr %s1063, 4
        %s1065 = smul.addr %s1064, 8
        %s1066 = scalar_lea.vmem %s10, %s1065
        // Predicated region
        $region65: #{tpu_custom_call.1} parent=59 // pred_check
          %p1067 = pneg %p255
        $region66: #{tpu_custom_call.1} parent=59 // pred_check_branch
          %1069 = sbr.rel (%p1067) target = $region68
        $region67: #{tpu_custom_call.1} parent=59 // pred_region
          _
        $region68: #{tpu_custom_call.1} parent=59 // pred_fallthru
          _
      $region60: #{tpu_custom_call.1} parent=5 // pred_fallthru
        _
      %p1070 = scmp.le.s32.totalorder 2, %s17
      // Predicated region
      $region69: #{tpu_custom_call.1} parent=5 // pred_check
        %p1071 = pneg %p1070
      $region70: #{tpu_custom_call.1} parent=5 // pred_check_branch
        %1073 = sbr.rel (%p1071) target = $region72
      $region71: #{tpu_custom_call.1} parent=5 // pred_region
        %s1074 = ssub.s32 %s17, 2
        // Predicated region
        $region73: #{tpu_custom_call.1} parent=71 // pred_check
          %p1075 = pneg %p261
        $region74: #{tpu_custom_call.1} parent=71 // pred_check_branch
          %1077 = sbr.rel (%p1075) target = $region76
        $region75: #{tpu_custom_call.1} parent=71 // pred_region
          %p1078 = scmp.lt.s32.totalorder %s23, 1
          %s1079 = scalar_select %p1078, %s23, 1
          %s1080 = smul.addr %s1079, 4
          %s1081 = smul.addr %s1080, 8
          %s1082 = scalar_lea.vmem %s10, %s1081
        $region76: #{tpu_custom_call.1} parent=71 // pred_fallthru
          _
      $region72: #{tpu_custom_call.1} parent=5 // pred_fallthru
        _
    $region6: #{tpu_custom_call.1} parent=1 // loop_footer
      %s21 = sadd.s32 1, %s17
    $region7: #{tpu_custom_call.1} parent=1 // loop_footer_branch
      %16 = sbr.rel target = $region3
    $region8: #{tpu_custom_call.1} parent=1 // loop_exit
      _
    %1083 = vsyncpa [#allocation4], 1
    %s1084 = scalar_lea.sflag [#allocation4], 1
    %1085 = vsyncpa %s1084, 1

</llo_original>
